<compile_context>
chip_gen: v7x
topology: tpu7x:2x2x1
jax: 0.10.0
libtpu: 0.0.40
codegen_flags: <defaults>
</compile_context>

<pallas_src>
import functools

import jax
import jax.numpy as jnp
from jax.experimental import pallas as pl
from jax.experimental.pallas import tpu as pltpu

EPS = 0.1


def _ls_ce_kernel(x_ref, t_ref, out_ref, *, n_rows, eps):
    # x_ref: (TM, C) logits, t_ref: (TM, 1) int32 labels,
    # out_ref: (1, 1) f32 SMEM accumulator / final result.
    pid = pl.program_id(0)

    @pl.when(pid == 0)
    def _init():
        out_ref[0, 0] = jnp.float32(0.0)

    x = x_ref[...].astype(jnp.float32)                        # (TM, C)
    tm, c = x.shape

    # Numerically stable log-sum-exp per row.
    m = jnp.max(x, axis=-1, keepdims=True)                    # (TM, 1)
    lse = jnp.log(jnp.sum(jnp.exp(x - m), axis=-1, keepdims=True)) + m

    # Remaining lane reductions over the same loaded tile (no log_preds /
    # one-hot materialization).
    sum_x = jnp.sum(x, axis=-1, keepdims=True)                # (TM, 1)
    col = jax.lax.broadcasted_iota(jnp.int32, (tm, c), 1)     # (TM, C)
    x_t = jnp.sum(jnp.where(col == t_ref[...], x, 0.0),
                  axis=-1, keepdims=True)                     # (TM, 1)

    #   smooth_row = -sum_c log_softmax(x)_c   = C*lse - sum_x
    #   nll_row    = -log_softmax(x)[target]   = lse - x[target]
    smooth_row = c * lse - sum_x
    nll_row = lse - x_t
    per_row = (eps / c) * smooth_row + (1.0 - eps) * nll_row  # (TM, 1)

    # Mask padded rows of the final partial tile.
    row = jax.lax.broadcasted_iota(jnp.int32, (tm, 1), 0) + pid * tm
    per_row = jnp.where(row < n_rows, per_row, 0.0)

    out_ref[0, 0] += jnp.sum(per_row)

    @pl.when(pid == pl.num_programs(0) - 1)
    def _finalize():
        out_ref[0, 0] = out_ref[0, 0] / n_rows


def _pick_block_rows(n, c, itemsize):
    # Keep one logits slab ~<= 6 MiB so 2 pipeline buffers (+ tiny targets)
    # stay well inside a 32 MiB scoped-VMEM budget (safe on v5e/v6e/v7x).
    budget = 6 * 1024 * 1024
    tm = budget // max(1, c * itemsize)
    tm = int(min(max(tm, 8), 1024))
    tm = (tm // 8) * 8
    if tm >= n:
        return n                      # single block covering the full batch
    return tm


def label_smoothing_cross_entropy(output, target, *, eps=EPS, block_rows=None):
    """output: (N, C) float logits (f32 or bf16), target: (N,) int labels -> scalar f32."""
    n, c = output.shape
    if block_rows is None:
        block_rows = _pick_block_rows(n, c, jnp.dtype(output.dtype).itemsize)
    tm = int(block_rows)
    grid = (pl.cdiv(n, tm),)
    t2d = target.astype(jnp.int32).reshape(n, 1)

    kernel = functools.partial(_ls_ce_kernel, n_rows=n, eps=float(eps))
    out = pl.pallas_call(
        kernel,
        out_shape=jax.ShapeDtypeStruct((1, 1), jnp.float32),
        grid=grid,
        in_specs=[
            pl.BlockSpec((tm, c), lambda i: (i, 0)),
            pl.BlockSpec((tm, 1), lambda i: (i, 0)),
        ],
        out_specs=pl.BlockSpec(memory_space=pltpu.MemorySpace.SMEM),
        compiler_params=pltpu.CompilerParams(
            dimension_semantics=("arbitrary",),
            vmem_limit_bytes=32 * 1024 * 1024,
        ),
    )(output, t2d)
    return out[0, 0]


def _reference(output, target, eps=EPS):
    # Pure-JAX reference of the PyTorch forward (reduction='mean').
    c = output.shape[-1]
    log_preds = jax.nn.log_softmax(output.astype(jnp.float32), axis=-1)
    loss = jnp.mean(-jnp.sum(log_preds, axis=-1))
    nll = jnp.mean(-jnp.take_along_axis(log_preds, target[:, None], axis=-1)[:, 0])
    return loss * eps / c + (1.0 - eps) * nll


if __name__ == "__main__":
    key = jax.random.PRNGKey(0)
    k1, k2 = jax.random.split(key)
    # N=20 with block_rows=8 -> grid of 3 with a padded final tile (4 valid rows):
    # exercises init / accumulate / finalize and the remainder-row masking.
    N, C = 20, 128
    logits = jax.random.normal(k1, (N, C), dtype=jnp.float32)
    labels = jax.random.randint(k2, (N,), 0, C, dtype=jnp.int32)

    loss = label_smoothing_cross_entropy(logits, labels, block_rows=8)
    jax.block_until_ready(loss)
    ref = _reference(logits, labels)
    assert jnp.allclose(loss, ref, atol=1e-5, rtol=1e-5), (loss, ref)

    # bf16 logits path (native-dtype DMA, in-kernel upcast).
    logits_bf16 = logits.astype(jnp.bfloat16)
    loss_bf16 = label_smoothing_cross_entropy(logits_bf16, labels, block_rows=8)
    jax.block_until_ready(loss_bf16)
    ref_bf16 = _reference(logits_bf16, labels)
    assert jnp.allclose(loss_bf16, ref_bf16, atol=1e-4, rtol=1e-4), (loss_bf16, ref_bf16)

    print("KERNEL_OK")
</pallas_src>

<mosaic_0001>
module attributes {stable_mosaic.version = 11 : i64} {
  func.func @_ls_ce_kernel(%arg0: i32, %arg1: memref<8x128xf32, #tpu.memory_space<vmem>>, %arg2: memref<8x1xi32, #tpu.memory_space<vmem>>, %arg3: memref<1x1xf32, #tpu.memory_space<smem>>) attributes {dimension_semantics = [#tpu.dimension_semantics<arbitrary>], iteration_bounds = array<i64: 3>, scalar_prefetch = 0 : i64, scratch_operands = 0 : i64, tpu.core_type = #tpu.core_type<tc>, window_params = [{transform_indices = @transform_0, window_bounds = array<i64: 8, 128>}, {transform_indices = @transform_1, window_bounds = array<i64: 8, 1>}, {transform_indices = @transform_2, window_bounds = array<i64: 1, 1>}]} {
    %c0_i32 = arith.constant 0 : i32
    %0 = arith.cmpi eq, %arg0, %c0_i32 : i32
    %1 = arith.extui %0 : i1 to i32
    %c0_i32_0 = arith.constant 0 : i32
    %2 = arith.cmpi ne, %1, %c0_i32_0 : i32
    scf.if %2 {
      %cst_18 = arith.constant 0.000000e+00 : f32
      %c0_19 = arith.constant 0 : index
      %c0_20 = arith.constant 0 : index
      %50 = memref.load %arg3[%c0_19, %c0_20] : memref<1x1xf32, #tpu.memory_space<smem>>
      memref.store %cst_18, %arg3[%c0_19, %c0_20] : memref<1x1xf32, #tpu.memory_space<smem>>
    } else {
    }
    %c0 = arith.constant 0 : index
    %c0_1 = arith.constant 0 : index
    %3 = vector.load %arg1[%c0, %c0_1] : memref<8x128xf32, #tpu.memory_space<vmem>>, vector<8x128xf32>
    %cst = arith.constant dense<0xFF800000> : vector<8xf32>
    %4 = vector.multi_reduction <maximumf>, %3, %cst [1] : vector<8x128xf32> to vector<8xf32>
    %5 = vector.shape_cast %4 : vector<8xf32> to vector<8x1xf32>
    %6 = vector.broadcast %5 : vector<8x1xf32> to vector<8x128xf32>
    %7 = arith.subf %3, %6 : vector<8x128xf32>
    %8 = math.exp %7 : vector<8x128xf32>
    %cst_2 = arith.constant dense<0.000000e+00> : vector<8xf32>
    %9 = vector.multi_reduction <add>, %8, %cst_2 [1] : vector<8x128xf32> to vector<8xf32>
    %10 = vector.shape_cast %9 : vector<8xf32> to vector<8x1xf32>
    %11 = math.log %10 : vector<8x1xf32>
    %12 = arith.addf %11, %5 : vector<8x1xf32>
    %cst_3 = arith.constant dense<0.000000e+00> : vector<8xf32>
    %13 = vector.multi_reduction <add>, %3, %cst_3 [1] : vector<8x128xf32> to vector<8xf32>
    %14 = vector.shape_cast %13 : vector<8xf32> to vector<8x1xf32>
    %15 = tpu.iota {dimensions = array<i32: 1>} : vector<8x128xi32>
    %c0_4 = arith.constant 0 : index
    %c0_5 = arith.constant 0 : index
    %16 = vector.load %arg2[%c0_4, %c0_5] : memref<8x1xi32, #tpu.memory_space<vmem>>, vector<8x1xi32>
    %17 = vector.broadcast %16 : vector<8x1xi32> to vector<8x128xi32>
    %18 = arith.cmpi eq, %15, %17 : vector<8x128xi32>
    %cst_6 = arith.constant 0.000000e+00 : f32
    %19 = vector.broadcast %cst_6 : f32 to vector<8x128xf32>
    %20 = arith.select %18, %3, %19 : vector<8x128xi1>, vector<8x128xf32>
    %cst_7 = arith.constant dense<0.000000e+00> : vector<8xf32>
    %21 = vector.multi_reduction <add>, %20, %cst_7 [1] : vector<8x128xf32> to vector<8xf32>
    %22 = vector.shape_cast %21 : vector<8xf32> to vector<8x1xf32>
    %cst_8 = arith.constant 1.280000e+02 : f32
    %23 = vector.broadcast %cst_8 : f32 to vector<8x1xf32>
    %24 = arith.mulf %23, %12 : vector<8x1xf32>
    %25 = arith.subf %24, %14 : vector<8x1xf32>
    %26 = arith.subf %12, %22 : vector<8x1xf32>
    %cst_9 = arith.constant 7.812500e-04 : f32
    %27 = vector.broadcast %cst_9 : f32 to vector<8x1xf32>
    %28 = arith.mulf %27, %25 : vector<8x1xf32>
    %cst_10 = arith.constant 0.899999976 : f32
    %29 = vector.broadcast %cst_10 : f32 to vector<8x1xf32>
    %30 = arith.mulf %29, %26 : vector<8x1xf32>
    %31 = arith.addf %28, %30 : vector<8x1xf32>
    %32 = tpu.iota {dimensions = array<i32: 0>} : vector<8x1xi32>
    %c8_i32 = arith.constant 8 : i32
    %33 = arith.muli %arg0, %c8_i32 : i32
    %34 = vector.broadcast %33 : i32 to vector<8x1xi32>
    %35 = arith.addi %32, %34 : vector<8x1xi32>
    %c20_i32 = arith.constant 20 : i32
    %36 = vector.broadcast %c20_i32 : i32 to vector<8x1xi32>
    %37 = arith.cmpi slt, %35, %36 : vector<8x1xi32>
    %cst_11 = arith.constant 0.000000e+00 : f32
    %38 = vector.broadcast %cst_11 : f32 to vector<8x1xf32>
    %39 = arith.select %37, %31, %38 : vector<8x1xi1>, vector<8x1xf32>
    %c0_12 = arith.constant 0 : index
    %c0_13 = arith.constant 0 : index
    %40 = memref.load %arg3[%c0_12, %c0_13] : memref<1x1xf32, #tpu.memory_space<smem>>
    %41 = vector.shape_cast %39 : vector<8x1xf32> to vector<1x8x1xf32>
    %cst_14 = arith.constant dense<0.000000e+00> : vector<1xf32>
    %42 = vector.multi_reduction <add>, %41, %cst_14 [1, 2] : vector<1x8x1xf32> to vector<1xf32>
    %43 = vector.shape_cast %42 : vector<1xf32> to vector<1x1x1xf32>
    %44 = vector.extract %43[0, 0, 0] : f32 from vector<1x1x1xf32>
    %45 = arith.addf %40, %44 : f32
    %c0_15 = arith.constant 0 : index
    %c0_16 = arith.constant 0 : index
    %46 = memref.load %arg3[%c0_15, %c0_16] : memref<1x1xf32, #tpu.memory_space<smem>>
    memref.store %45, %arg3[%c0_15, %c0_16] : memref<1x1xf32, #tpu.memory_space<smem>>
    %c2_i32 = arith.constant 2 : i32
    %47 = arith.cmpi eq, %arg0, %c2_i32 : i32
    %48 = arith.extui %47 : i1 to i32
    %c0_i32_17 = arith.constant 0 : i32
    %49 = arith.cmpi ne, %48, %c0_i32_17 : i32
    scf.if %49 {
      %c0_18 = arith.constant 0 : index
      %c0_19 = arith.constant 0 : index
      %50 = memref.load %arg3[%c0_18, %c0_19] : memref<1x1xf32, #tpu.memory_space<smem>>
      %cst_20 = arith.constant 2.000000e+01 : f32
      %51 = arith.divf %50, %cst_20 : f32
      %c0_21 = arith.constant 0 : index
      %c0_22 = arith.constant 0 : index
      %52 = memref.load %arg3[%c0_21, %c0_22] : memref<1x1xf32, #tpu.memory_space<smem>>
      memref.store %51, %arg3[%c0_21, %c0_22] : memref<1x1xf32, #tpu.memory_space<smem>>
    } else {
    }
    return
  }
  func.func @transform_0(%arg0: i32) -> (i32, i32) {
    %c0_i32 = arith.constant 0 : i32
    %c0_i32_0 = arith.constant 0 : i32
    return %arg0, %c0_i32 : i32, i32
  }
  func.func @transform_1(%arg0: i32) -> (i32, i32) {
    %c0_i32 = arith.constant 0 : i32
    %c0_i32_0 = arith.constant 0 : i32
    return %arg0, %c0_i32 : i32, i32
  }
  func.func @transform_2(%arg0: i32) -> (i32, i32) {
    %c0_i32 = arith.constant 0 : i32
    %c0_i32_0 = arith.constant 0 : i32
    %c0_i32_1 = arith.constant 0 : i32
    return %c0_i32, %c0_i32_0 : i32, i32
  }
}

</mosaic_0001>

<llo_original>
// kernel: tpu_custom_call.1
$region0: #{tpu_custom_call.1}
  #allocation0 [shape = 'u32[]', space=smem, size = 0x4, offset = 0x4, fixed_abs, tag = 'smem constant byte address 0x4 - core index']
  #allocation1 [shape = 'u32[144,128]{1,0:T(1,128)}', space=vmem, size = 0x12000, scoped, tag = 'internal scratch']
  %s0 = inlined_call_operand.vmem [shape: f32[20,128], index: 0, kind: input, shape index: {}]
  %s1 = inlined_call_operand.vmem [shape: s32[20,1], index: 1, kind: input, shape index: {}]
  %s2 = inlined_call_operand.hbm [shape: f32[1,1], index: 2, kind: output, shape index: {}]
  %s3 = sld [smem:[#allocation0]]
  $region49: #{tpu_custom_call.1} parent=0
    _
  %s5 = ssub.s32 1, %s3
  %s6 = scalar_select 0, %s5, %s3
  $region1: #{tpu_custom_call.1} parent=0
    #allocation2 [shape = 'u8[512]{0}', space=smem, size = 0x200, scoped, tag = 'output window, operand 0, single buffered']
    #allocation3 [shape = 's32[2]{0}', space=sflag, size = 0x8, scoped, tag = 'scoped memory for tpu_custom_call.1']
    %7 = vsyncpa [#allocation3], 0
    loop: start=0, step=1, limit=5
    $region2: #{tpu_custom_call.1} parent=1 // loop_pre_header
      _
    $region3: #{tpu_custom_call.1} parent=1 // loop_header
      %s9 = sphi 0, %s13
      %p10 = scmp.ge.s32.totalorder %s9, 5
      %s19 = sphi 0, %s21
      %s22 = sphi 0, %s19
      %s23 = sphi 0, %s22
      %s39 = sphi 0, %s23
      %s45 = sphi 0, %s47
      %s48 = sphi 0, %s45
      %s49 = sphi 0, %s48
      %s65 = sphi 0, %s49
      %s69 = sphi 0, %s69
      %s71 = sphi 0, %s69
      %s72 = sphi 0, %s71
      %s86 = sphi 0, %s72
    $region4: #{tpu_custom_call.1} parent=1 // loop_header_branch
      %12 = sbr.rel (%p10) target = $region8
    $region5: #{tpu_custom_call.1} parent=1 // loop_body
      %s14 = ssub.s32 %s9, 1
      %s15 = ssub.s32 %s9, 2
      %s16 = sadd.s32 %s9, 1
      %s17 = ssub.s32 %s9, %s16
      %p18 = scmp.eq.s32.totalorder %s17, 0
      %s20 = sadd.s32 %s19, 1
      %s21 = scalar_select %p18, %s19, %s20
      %p24 = pneg %p18
      %p25 = scmp.eq.s32.totalorder %s9, 2
      %p26 = por %p24, %p25
      %p27 = scmp.ne.s32.totalorder %s19, %s22
      %p28 = scmp.eq.s32.totalorder %s9, 0
      %p29 = por %p27, %p28
      %p30 = scmp.ne.s32.totalorder %s19, %s22
      %p31 = scmp.eq.s32.totalorder %s14, 2
      %p32 = por %p30, %p31
      %p33 = scmp.ne.s32.totalorder %s22, %s23
      %p34 = scmp.eq.s32.totalorder %s14, 0
      %p35 = por %p33, %p34
      %p36 = scmp.ne.s32.totalorder %s22, %s23
      %p37 = scmp.eq.s32.totalorder %s15, 2
      %p38 = por %p36, %p37
      %p40 = scmp.ne.s32.totalorder %s23, %s39
      %p41 = scmp.eq.s32.totalorder %s15, 0
      %p42 = por %p40, %p41
      %s43 = ssub.s32 %s9, %s16
      %p44 = scmp.eq.s32.totalorder %s43, 0
      %s46 = sadd.s32 %s45, 1
      %s47 = scalar_select %p44, %s45, %s46
      %p50 = pneg %p44
      %p51 = scmp.eq.s32.totalorder %s9, 2
      %p52 = por %p50, %p51
      %p53 = scmp.ne.s32.totalorder %s45, %s48
      %p54 = scmp.eq.s32.totalorder %s9, 0
      %p55 = por %p53, %p54
      %p56 = scmp.ne.s32.totalorder %s45, %s48
      %p57 = scmp.eq.s32.totalorder %s14, 2
      %p58 = por %p56, %p57
      %p59 = scmp.ne.s32.totalorder %s48, %s49
      %p60 = scmp.eq.s32.totalorder %s14, 0
      %p61 = por %p59, %p60
      %p62 = scmp.ne.s32.totalorder %s48, %s49
      %p63 = scmp.eq.s32.totalorder %s15, 2
      %p64 = por %p62, %p63
      %p66 = scmp.ne.s32.totalorder %s49, %s65
      %p67 = scmp.eq.s32.totalorder %s15, 0
      %p68 = por %p66, %p67
      %s70 = sadd.s32 %s69, 1
      %p73 = scmp.eq.s32.totalorder %s9, 2
      %p74 = scmp.ne.s32.totalorder %s69, %s71
      %p75 = scmp.eq.s32.totalorder %s9, 0
      %p76 = por %p74, %p75
      %p77 = scmp.ne.s32.totalorder %s69, %s71
      %p78 = scmp.eq.s32.totalorder %s14, 2
      %p79 = por %p77, %p78
      %p80 = scmp.ne.s32.totalorder %s71, %s72
      %p81 = scmp.eq.s32.totalorder %s14, 0
      %p82 = por %p80, %p81
      %p83 = scmp.ne.s32.totalorder %s71, %s72
      %p84 = scmp.eq.s32.totalorder %s15, 2
      %p85 = por %p83, %p84
      %p87 = scmp.ne.s32.totalorder %s72, %s86
      %p88 = scmp.eq.s32.totalorder %s15, 0
      %p89 = por %p87, %p88
      %p90 = scmp.le.s32.totalorder 1, %s9
      %p91 = scmp.lt.s32.totalorder %s9, 4
      %p92 = pnand %p90, %p91
      %p93 = pneg %p92
      // Predicated region
      $region9: #{tpu_custom_call.1} parent=5 // pred_check
        _
      $region10: #{tpu_custom_call.1} parent=5 // pred_check_branch
        %95 = sbr.rel (%p92) target = $region12
      $region11: #{tpu_custom_call.1} parent=5 // pred_region
        %s96 = ssub.s32 %s9, 1
      $region12: #{tpu_custom_call.1} parent=5 // pred_fallthru
        _
      %p97 = scmp.lt.s32.totalorder %s9, 3
      // Predicated region
      $region13: #{tpu_custom_call.1} parent=5 // pred_check
        %p98 = pneg %p97
      $region14: #{tpu_custom_call.1} parent=5 // pred_check_branch
        %100 = sbr.rel (%p98) target = $region16
      $region15: #{tpu_custom_call.1} parent=5 // pred_region
        // Predicated region
        $region17: #{tpu_custom_call.1} parent=15 // pred_check
          %p101 = pneg %p29
        $region18: #{tpu_custom_call.1} parent=15 // pred_check_branch
          %103 = sbr.rel (%p101) target = $region20
        $region19: #{tpu_custom_call.1} parent=15 // pred_region
          %p104 = scmp.lt.s32.totalorder %s9, 2
          %s105 = scalar_select %p104, %s9, 2
          %s106 = smul.addr %s105, 8
          %s107 = scalar_lea.vmem %s0, %s106
        $region20: #{tpu_custom_call.1} parent=15 // pred_fallthru
          _
        // Predicated region
        $region21: #{tpu_custom_call.1} parent=15 // pred_check
          %p108 = pneg %p55
        $region22: #{tpu_custom_call.1} parent=15 // pred_check_branch
          %110 = sbr.rel (%p108) target = $region24
        $region23: #{tpu_custom_call.1} parent=15 // pred_region
          %p111 = scmp.lt.s32.totalorder %s9, 2
          %s112 = scalar_select %p111, %s9, 2
          %s113 = smul.addr %s112, 8
          %s114 = scalar_lea.vmem %s1, %s113
        $region24: #{tpu_custom_call.1} parent=15 // pred_fallthru
          _
      $region16: #{tpu_custom_call.1} parent=5 // pred_fallthru
        _
      %p115 = scmp.le.s32.totalorder 1, %s9
      %p116 = scmp.lt.s32.totalorder %s9, 4
      %p117 = pnand %p115, %p116
      %p118 = pneg %p117
      // Predicated region
      $region25: #{tpu_custom_call.1} parent=5 // pred_check
        _
      $region26: #{tpu_custom_call.1} parent=5 // pred_check_branch
        %120 = sbr.rel (%p117) target = $region28
      $region27: #{tpu_custom_call.1} parent=5 // pred_region
        %s121 = ssub.s32 %s9, 1
        %p122 = scmp.lt.s32.totalorder %s14, 2
        %s123 = scalar_select %p122, %s14, 2
        %s124 = smul.addr %s123, 8
        %s125 = scalar_lea.vmem %s0, %s124
        %p126 = pneg %p35
        %p127 = pneg %p32
        %p128 = scmp.lt.s32.totalorder %s14, 2
        %s129 = scalar_select %p128, %s14, 2
        %s130 = smul.addr %s129, 8
        %s131 = scalar_lea.vmem %s1, %s130
        %p132 = pneg %p61
        %p133 = pneg %p58
        %p134 = pneg %p82
        %p135 = pneg %p79
        %p136 = scmp.lt.s32.totalorder %s14, 2
        %s137 = scalar_select %p136, %s14, 2
        %s138 = smul.addr %s137, 8
        %s139 = scalar_lea.vmem %s0, %s138
        %p140 = scmp.lt.s32.totalorder %s14, 2
        %s141 = scalar_select %p140, %s14, 2
        %s142 = smul.addr %s141, 8
        %s143 = scalar_lea.vmem %s1, %s142
        %p144 = scmp.eq.s32.totalorder %s14, 0
        // Predicated region
        $region29: #{tpu_custom_call.1} parent=27 // pred_check
          %p145 = pneg %p144
        $region30: #{tpu_custom_call.1} parent=27 // pred_check_branch
          %147 = sbr.rel (%p145) target = $region32
        $region31: #{tpu_custom_call.1} parent=27 // pred_region
          %s148 = scalar_lea.smem [#allocation2], 0
          %149 = sst [smem:[%s148]] 0.0
        $region32: #{tpu_custom_call.1} parent=27 // pred_fallthru
          _
        %v150 = vld [vmem:[%s139] sm:$0xff]
        %151 = vmax.xlane.f32.xlu0 %v150
        %v152 = vpop.xlane.xlu0 %151
        %v153 = vsub.f32 %v150, %v152
        %v154 = vmul.f32 %v153, 1.442695
        %v155 = vpow.pop %v154
        %156 = vadd.xlane.f32.xlu0 %v155
        %v157 = vpop.xlane.xlu0 %156
        %v158 = vlog2.pop %v157
        %v159 = vmul.f32 %v158, 0.6931472
        %v160 = vadd.f32 %v159, %v152
        %161 = vadd.xlane.f32.xlu0 %v150
        %v162 = vpop.xlane.xlu0 %161
        %v163 = vlaneseq
        %v164 = vand.u32 %v163, 127
        %v165 = vld [vmem:[%s143] sm:$0xff]
        %166 = vset.pattern.permute.xlu0 0
        %167 = vperm.xlu0 %166, %v165
        %v168 = vpop.permute.xlu0 %167
        %vm169 = vcmp.eq.s32.totalorder %v164, %v168
        %v170 = vsel %vm169, %v150, 0.0
        %171 = vadd.xlane.f32.xlu0 %v170
        %v172 = vpop.xlane.xlu0 %171
        %v173 = vmul.f32 %v160, 128.0
        %v174 = vsub.f32 %v173, %v162
        %v175 = vsub.f32 %v160, %v172
        %v176 = vmul.f32 %v174, 0.00078125
        %v177 = vmul.f32 %v175, 0.9
        %v178 = vadd.f32 %v176, %v177
        %v179 = vlaneseq
        %v180 = vshrl.u32 %v179, 7
        %s181 = smul.u32 %s14, 8
        %v182 = vstv %s181
        %v183 = vadd.s32 %v180, %v182
        %vm184 = vcmp.lt.s32.totalorder %v183, 20
        %v185 = vsel %vm184, %v178, 0.0
        %s186 = sld [smem:[#allocation2]]
        %vm187 = vcmask 7168
        %v188 = vsel %vm187, %v185, 0.0
        %189 = vadd.xlane.f32.xlu0 %v188
        %v190 = vpop.xlane.xlu0 %189
        %v191 = vrot.slane %v190, 4
        %v192 = vadd.f32 %v190, %v191
        %v193 = vrot.slane %v192, 2
        %v194 = vadd.f32 %v192, %v193
        %v195 = vrot.slane %v194, 1
        %v196 = vadd.f32 %v194, %v195
        %s197 = vtos %v196
        %s198 = sadd.f32 %s186, %s197
        %s199 = scalar_lea.smem [#allocation2], 0
        %200 = sst [smem:[%s199]] %s198
        %p201 = scmp.eq.s32.totalorder %s14, 2
        // Predicated region
        $region33: #{tpu_custom_call.1} parent=27 // pred_check
          %p202 = pneg %p201
        $region34: #{tpu_custom_call.1} parent=27 // pred_check_branch
          %204 = sbr.rel (%p202) target = $region36
        $region35: #{tpu_custom_call.1} parent=27 // pred_region
          %s205 = sld [smem:[#allocation2]]
          %v206 = vrcp.pop 20.0
          %s207 = vtos %v206
          %s208 = smul.f32 %s205, %s207
          %209 = sst [smem:[%s199]] %s208
        $region36: #{tpu_custom_call.1} parent=27 // pred_fallthru
          _
        // Predicated region
        $region37: #{tpu_custom_call.1} parent=27 // pred_check
          %p210 = pneg %p79
        $region38: #{tpu_custom_call.1} parent=27 // pred_check_branch
          %212 = sbr.rel (%p210) target = $region40
        $region39: #{tpu_custom_call.1} parent=27 // pred_region
          %s214 = ssub.s32 16, 16
          %215 = vsyncadd [#allocation3], %s214
          %218 = dma.smem_to_hbm [#allocation2], 16, %s2, [#allocation3]
        $region40: #{tpu_custom_call.1} parent=27 // pred_fallthru
          _
        // Predicated region
        $region41: #{tpu_custom_call.1} parent=27 // pred_check
          %p219 = pneg %p79
        $region42: #{tpu_custom_call.1} parent=27 // pred_check_branch
          %221 = sbr.rel (%p219) target = $region44
        $region43: #{tpu_custom_call.1} parent=27 // pred_region
          %222 = dma.done [#allocation3], 16
        $region44: #{tpu_custom_call.1} parent=27 // pred_fallthru
          _
        %223 = sfence
      $region28: #{tpu_custom_call.1} parent=5 // pred_fallthru
        _
      %p224 = scmp.le.s32.totalorder 2, %s9
      // Predicated region
      $region45: #{tpu_custom_call.1} parent=5 // pred_check
        %p225 = pneg %p224
      $region46: #{tpu_custom_call.1} parent=5 // pred_check_branch
        %227 = sbr.rel (%p225) target = $region48
      $region47: #{tpu_custom_call.1} parent=5 // pred_region
        %s228 = ssub.s32 %s9, 2
      $region48: #{tpu_custom_call.1} parent=5 // pred_fallthru
        _
    $region6: #{tpu_custom_call.1} parent=1 // loop_footer
      %s13 = sadd.s32 1, %s9
    $region7: #{tpu_custom_call.1} parent=1 // loop_footer_branch
      %8 = sbr.rel target = $region3
    $region8: #{tpu_custom_call.1} parent=1 // loop_exit
      _
    %229 = vsyncpa [#allocation3], 1
    %s230 = scalar_lea.sflag [#allocation3], 1
    %231 = vsyncpa %s230, 1

</llo_original>
